<compile_context>
chip_gen: v6e
topology: v6e:2x2x1
jax: 0.10.0
libtpu: 0.0.40
codegen_flags: <defaults>
</compile_context>

<pallas_src>
import functools

import jax
import jax.numpy as jnp
from jax import lax
from jax.experimental import pallas as pl
from jax.experimental.pallas import tpu as pltpu


# ---------------------------------------------------------------------------
# Kernels
# ---------------------------------------------------------------------------

def _dequant_matmul(x, w_i8):
    """direct_cast_dequantize + (tm,tk)@(tk,tn) contraction on the MXU.

    The int8 weight tile arrives pre-transposed as (tk, tn): K already sits on
    the sublane axis (canonical MXU RHS), so no per-step transpose is needed.
    """
    if x.dtype == jnp.float32:
        # f32 x f32 is MXU-emulated at <=1/3 rate. int8 is exactly
        # representable in bf16, so only the activation needs a hi/lo split:
        # two full-rate bf16 passes with f32 accumulation.
        w = w_i8.astype(jnp.bfloat16)
        x_hi = x.astype(jnp.bfloat16)
        x_lo = (x - x_hi.astype(jnp.float32)).astype(jnp.bfloat16)
        acc = jnp.dot(x_hi, w, preferred_element_type=jnp.float32)
        return acc + jnp.dot(x_lo, w, preferred_element_type=jnp.float32)
    # bf16 activations: direct cast of int8 is exact; native bf16 MXU matmul.
    return jnp.dot(x, w_i8.astype(x.dtype), preferred_element_type=jnp.float32)


def _qrow_kernel_single_k(scale_ref, x_ref, w_ref, b_ref, o_ref):
    """Whole K in one tile: no accumulator round-trip, no pl.when branches."""
    acc = _dequant_matmul(x_ref[...], w_ref[...])
    out = acc * scale_ref[0] + b_ref[...].astype(jnp.float32)
    o_ref[...] = out.astype(o_ref.dtype)


def _qrow_kernel_multi_k(scale_ref, x_ref, w_ref, b_ref, o_ref, acc_ref):
    """K split over innermost ('arbitrary') grid axis with f32 accumulator."""
    k = pl.program_id(2)

    @pl.when(k == 0)
    def _():
        acc_ref[...] = jnp.zeros_like(acc_ref)

    acc_ref[...] += _dequant_matmul(x_ref[...], w_ref[...])

    @pl.when(k == pl.num_programs(2) - 1)
    def _():
        out = acc_ref[...] * scale_ref[0] + b_ref[...].astype(jnp.float32)
        o_ref[...] = out.astype(o_ref.dtype)


# ---------------------------------------------------------------------------
# Tiling helpers
# ---------------------------------------------------------------------------

def _round_up(x, m):
    return (x + m - 1) // m * m


def _pick_tile(dim, max_tile, mult):
    """Largest tile (multiple of `mult`, <= max_tile) with modest padding."""
    dim_r = _round_up(dim, mult)
    if dim_r <= max_tile:
        return dim_r
    candidates = list(range(mult, max_tile + 1, mult))
    pad = lambda t: _round_up(dim, t) - dim
    ok = [t for t in candidates if pad(t) * 8 <= dim]  # <= 12.5% padding waste
    if ok:
        return max(ok)
    return min(candidates, key=lambda t: (pad(t), -t))


def _divisor_tiles(padded_dim, cap):
    """Multiples of 128 that divide `padded_dim` (itself a multiple of 128)."""
    return [d for d in range(128, min(cap, padded_dim) + 1, 128)
            if padded_dim % d == 0]


# ---------------------------------------------------------------------------
# Parameter prep (one-time, at load/quantization time — NOT per forward call)
# ---------------------------------------------------------------------------

def prepare_qrow_params(weight_q, bias):
    """Transpose the (N, K) int8 weight to (K, N) and zero-pad K/N to multiples
    of 128; pad bias to (1, Np). Doing this once removes the per-call HBM
    padding copy and puts K on the sublane axis (MXU-canonical RHS)."""
    N, K = weight_q.shape
    Kp, Np = _round_up(K, 128), _round_up(N, 128)
    wt = weight_q.T                                   # (K, N) int8
    if (Kp, Np) != (K, N):
        wt = jnp.pad(wt, ((0, Kp - K), (0, Np - N)))
    b2 = bias.reshape(1, N)
    if Np != N:
        b2 = jnp.pad(b2, ((0, 0), (0, Np - N)))
    return wt, b2


# ---------------------------------------------------------------------------
# Forward
# ---------------------------------------------------------------------------

@functools.partial(jax.jit,
                   static_argnames=("out_features", "tm_max", "tn_max", "tk_max"))
def quantized_row_parallel_forward(x, wt_padded, scale, bias_padded, *,
                                   out_features,
                                   tm_max=512, tn_max=512, tk_max=2048):
    """x: [B, S, K] (f32 or bf16); wt_padded: [Kp, Np] int8 (prepare_qrow_params);
    scale: [1] f32; bias_padded: [1, Np]. Returns [B, S, out_features]."""
    B, S, K = x.shape
    Kp, Np = wt_padded.shape
    N = out_features
    assert Kp % 128 == 0 and Np % 128 == 0, "use prepare_qrow_params()"
    assert Kp >= K and Np >= N
    M = B * S

    # --- tile selection ------------------------------------------------------
    # tm: dtype-aware sublane multiple (bf16 packs 16 rows per sublane group).
    sub_mult = 16 if jnp.dtype(x.dtype).itemsize == 2 else 8
    tm = _pick_tile(M, tm_max, sub_mult)
    Mp = _round_up(M, tm)
    # tk: full K when it fits -> single-K kernel with no accumulator.
    tk = max(_divisor_tiles(Kp, tk_max))
    # tn: largest 128-multiple divisor of Np; for decode-sized M (one i block)
    # prefer >= 2 j blocks so both v7x TensorCores get parallel work.
    tn_cands = _divisor_tiles(Np, tn_max)
    if Mp // tm < 2:
        two = [t for t in tn_cands if Np // t >= 2]
        tn = max(two) if two else max(tn_cands)
    else:
        tn = max(tn_cands)

    gi, gj, gk = Mp // tm, Np // tn, Kp // tk

    # --- activation padding (cheap, per-call; weight/bias already padded) ----
    x2 = x.reshape(M, K)
    if (Mp, Kp) != (M, K):
        x2 = jnp.pad(x2, ((0, Mp - M), (0, Kp - K)))

    # --- VMEM budget from the actual tile set, capped for v7x (64 MiB) -------
    xb = jnp.dtype(x.dtype).itemsize
    bb = jnp.dtype(bias_padded.dtype).itemsize
    est = (2 * tm * tk * xb        # x, double-buffered
           + 2 * tk * tn           # int8 weight, double-buffered
           + 2 * tn * bb           # bias
           + 2 * tm * tn * xb)     # output
    if gk > 1:
        est += tm * tn * 4         # f32 accumulator scratch
    vmem_limit = int(min(48 << 20, max(16 << 20, 2 * est + (4 << 20))))

    scale_f32 = scale.reshape(1).astype(jnp.float32)

    if gk == 1:
        kernel = _qrow_kernel_single_k
        grid = (gi, gj)
        x_map = lambda i, j: (i, 0)
        w_map = lambda i, j: (0, j)
        b_map = lambda i, j: (0, j)
        o_map = lambda i, j: (i, j)
        scratch = []
        dims_sem = ("parallel", "parallel")
    else:
        kernel = _qrow_kernel_multi_k
        grid = (gi, gj, gk)
        x_map = lambda i, j, k: (i, k)
        w_map = lambda i, j, k: (k, j)
        b_map = lambda i, j, k: (0, j)
        o_map = lambda i, j, k: (i, j)
        scratch = [pltpu.VMEM((tm, tn), jnp.float32)]
        dims_sem = ("parallel", "parallel", "arbitrary")

    out = pl.pallas_call(
        kernel,
        out_shape=jax.ShapeDtypeStruct((Mp, Np), x.dtype),
        grid_spec=pltpu.PrefetchScalarGridSpec(
            num_scalar_prefetch=0,
            grid=grid,
            in_specs=[
                # per-tensor scale lives in SMEM, untiled
                pl.BlockSpec(memory_space=pltpu.MemorySpace.SMEM),
                pl.BlockSpec((tm, tk), x_map),     # x activations
                # TODO(synk): pipeline_mode=pl.Buffered(3) if weight DMA exposed.
                pl.BlockSpec((tk, tn), w_map),     # W^T (K x N, int8)
                pl.BlockSpec((1, tn), b_map),      # bias
            ],
            out_specs=pl.BlockSpec((tm, tn), o_map),
            scratch_shapes=scratch,
        ),
        compiler_params=pltpu.CompilerParams(
            dimension_semantics=dims_sem,
            vmem_limit_bytes=vmem_limit,
        ),
    )(scale_f32, x2, wt_padded, bias_padded)

    return out[:M, :N].reshape(B, S, N)


# ---------------------------------------------------------------------------
# Demo / self-test
# ---------------------------------------------------------------------------

if __name__ == "__main__":
    # Module config: input_size (hidden) = 1024, output_size = 320, bias=True,
    # per_tensor_symmetric int8 quantization, world_size = 1.
    batch, seq = 2, 8
    input_size, output_size = 1024, 320

    key = jax.random.PRNGKey(0)
    kx, kw, kb = jax.random.split(key, 3)

    x = jax.random.normal(kx, (batch, seq, input_size), dtype=jnp.float32)
    weight_q = jax.random.randint(
        kw, (output_size, input_size), -128, 128, dtype=jnp.int8)
    scale = jnp.array([0.05], dtype=jnp.float32)
    bias = jax.random.normal(kb, (output_size,), dtype=jnp.float32)

    # One-time parameter prep (transpose to (K, N) + pad) -- outside the jit.
    wt_pad, bias_pad = prepare_qrow_params(weight_q, bias)

    x2 = x.reshape(-1, input_size)

    # --- f32 activations (module default dtype=torch.float32) ----------------
    out_f32 = jax.block_until_ready(
        quantized_row_parallel_forward(x, wt_pad, scale, bias_pad,
                                       out_features=output_size))
    ref_f32 = (jnp.dot(x2, weight_q.astype(jnp.float32).T,
                       precision=lax.Precision.HIGHEST)
               * scale[0] + bias).reshape(batch, seq, output_size)
    assert out_f32.shape == (batch, seq, output_size)
    assert out_f32.dtype == jnp.float32
    assert jnp.allclose(out_f32, ref_f32, rtol=5e-3, atol=5e-2)

    # --- multi-K-tile (accumulator) path coverage -----------------------------
    out_f32_mk = jax.block_until_ready(
        quantized_row_parallel_forward(x, wt_pad, scale, bias_pad,
                                       out_features=output_size, tk_max=256))
    assert jnp.allclose(out_f32_mk, ref_f32, rtol=5e-3, atol=5e-2)

    # --- bf16 activations (common production dtype; full-rate bf16 MXU) ------
    x_bf16 = x.astype(jnp.bfloat16)
    bias_bf16 = bias.astype(jnp.bfloat16)
    _, bias_bf16_pad = prepare_qrow_params(weight_q, bias_bf16)
    out_bf16 = jax.block_until_ready(
        quantized_row_parallel_forward(x_bf16, wt_pad, scale, bias_bf16_pad,
                                       out_features=output_size))
    dims = (((1,), (1,)), ((), ()))
    ref_bf16 = (lax.dot_general(x_bf16.reshape(-1, input_size),
                                weight_q.astype(jnp.bfloat16), dims,
                                preferred_element_type=jnp.float32)
                * scale[0] + bias_bf16.astype(jnp.float32)
                ).astype(jnp.bfloat16).reshape(batch, seq, output_size)
    assert out_bf16.dtype == jnp.bfloat16
    assert jnp.allclose(out_bf16.astype(jnp.float32),
                        ref_bf16.astype(jnp.float32), rtol=2e-2, atol=1.0)

    # TODO(synk): tensor-parallel collectives (scatter / all-reduce /
    # reduce-scatter) are identities at world_size=1 and are not emulated here.
    print("KERNEL_OK")
</pallas_src>

<mosaic_0001>
module attributes {stable_mosaic.version = 11 : i64} {
  func.func @_qrow_kernel_single_k(%arg0: i32, %arg1: i32, %arg2: memref<1xf32, #tpu.memory_space<smem>>, %arg3: memref<16x1024xf32, #tpu.memory_space<vmem>>, %arg4: memref<1024x128xi8, #tpu.memory_space<vmem>>, %arg5: memref<1x128xf32, #tpu.memory_space<vmem>>, %arg6: memref<16x128xf32, #tpu.memory_space<vmem>>) attributes {dimension_semantics = [#tpu.dimension_semantics<parallel>, #tpu.dimension_semantics<parallel>], iteration_bounds = array<i64: 1, 3>, scalar_prefetch = 0 : i64, scratch_operands = 0 : i64, tpu.core_type = #tpu.core_type<tc>, window_params = [{transform_indices = @transform_0, window_bounds = array<i64: 1>}, {transform_indices = @transform_1, window_bounds = array<i64: 16, 1024>}, {transform_indices = @transform_2, window_bounds = array<i64: 1024, 128>}, {transform_indices = @transform_3, window_bounds = array<i64: 1, 128>}, {transform_indices = @transform_4, window_bounds = array<i64: 16, 128>}]} {
    %c0 = arith.constant 0 : index
    %c0_0 = arith.constant 0 : index
    %0 = vector.load %arg3[%c0, %c0_0] : memref<16x1024xf32, #tpu.memory_space<vmem>>, vector<16x1024xf32>
    %c0_1 = arith.constant 0 : index
    %c0_2 = arith.constant 0 : index
    %1 = vector.load %arg4[%c0_1, %c0_2] : memref<1024x128xi8, #tpu.memory_space<vmem>>, vector<1024x128xi8>
    %2 = arith.sitofp %1 : vector<1024x128xi8> to vector<1024x128xbf16>
    %3 = arith.truncf %0 : vector<16x1024xf32> to vector<16x1024xbf16>
    %4 = arith.extf %3 : vector<16x1024xbf16> to vector<16x1024xf32>
    %5 = arith.subf %0, %4 : vector<16x1024xf32>
    %6 = arith.truncf %5 : vector<16x1024xf32> to vector<16x1024xbf16>
    %cst = arith.constant dense<0.000000e+00> : vector<16x128xf32>
    %7 = tpu.matmul %3, %2, %cst {dimension_numbers = #tpu.dot_dimension_numbers<[1], [0], [0], [1], [0, 0, 1, 1], [], []>} : vector<16x1024xbf16>, vector<1024x128xbf16>, vector<16x128xf32> -> vector<16x128xf32>
    %cst_3 = arith.constant dense<0.000000e+00> : vector<16x128xf32>
    %8 = tpu.matmul %6, %2, %cst_3 {dimension_numbers = #tpu.dot_dimension_numbers<[1], [0], [0], [1], [0, 0, 1, 1], [], []>} : vector<16x1024xbf16>, vector<1024x128xbf16>, vector<16x128xf32> -> vector<16x128xf32>
    %9 = arith.addf %7, %8 : vector<16x128xf32>
    %c0_4 = arith.constant 0 : index
    %10 = memref.load %arg2[%c0_4] : memref<1xf32, #tpu.memory_space<smem>>
    %11 = vector.broadcast %10 : f32 to vector<16x128xf32>
    %12 = arith.mulf %9, %11 : vector<16x128xf32>
    %c0_5 = arith.constant 0 : index
    %c0_6 = arith.constant 0 : index
    %13 = vector.load %arg5[%c0_5, %c0_6] : memref<1x128xf32, #tpu.memory_space<vmem>>, vector<1x128xf32>
    %14 = vector.broadcast %13 : vector<1x128xf32> to vector<16x128xf32>
    %15 = arith.addf %12, %14 : vector<16x128xf32>
    %c0_7 = arith.constant 0 : index
    %c0_8 = arith.constant 0 : index
    %16 = vector.load %arg6[%c0_7, %c0_8] : memref<16x128xf32, #tpu.memory_space<vmem>>, vector<16x128xf32>
    tpu.vector_store %arg6[%c0_7, %c0_8], %15 {strides = array<i32>} : memref<16x128xf32, #tpu.memory_space<vmem>>, vector<16x128xf32>,
    return
  }
  func.func @transform_0(%arg0: i32, %arg1: i32) -> i32 {
    %c0_i32 = arith.constant 0 : i32
    %c0_i32_0 = arith.constant 0 : i32
    return %c0_i32 : i32
  }
  func.func @transform_1(%arg0: i32, %arg1: i32) -> (i32, i32) {
    %c0_i32 = arith.constant 0 : i32
    %c0_i32_0 = arith.constant 0 : i32
    return %arg0, %c0_i32 : i32, i32
  }
  func.func @transform_2(%arg0: i32, %arg1: i32) -> (i32, i32) {
    %c0_i32 = arith.constant 0 : i32
    %c0_i32_0 = arith.constant 0 : i32
    return %c0_i32, %arg1 : i32, i32
  }
  func.func @transform_3(%arg0: i32, %arg1: i32) -> (i32, i32) {
    %c0_i32 = arith.constant 0 : i32
    %c0_i32_0 = arith.constant 0 : i32
    return %c0_i32, %arg1 : i32, i32
  }
  func.func @transform_4(%arg0: i32, %arg1: i32) -> (i32, i32) {
    %c0_i32 = arith.constant 0 : i32
    return %arg0, %arg1 : i32, i32
  }
}

</mosaic_0001>

<llo_original>
// kernel: quantized_row_parallel_forward.1
$region0: #{quantized_row_parallel_forward.1}
  #allocation0 [shape = 'u32[]', space=smem, size = 0x4, offset = 0x4, fixed_abs, tag = 'smem constant byte address 0x4 - core index']
  #allocation1 [shape = 'u32[144,128]{1,0:T(1,128)}', space=vmem, size = 0x12000, scoped, tag = 'internal scratch']
  #allocation2 [shape = 'f32[1]{0:T(128)S(6)}', space=smem, size = 0x200, scoped, tag = 'scoped memory for quantized_row_parallel_forward.1']
  %s0 = inlined_call_operand.<no memory space> [shape: f32[1], index: 0, kind: input, shape index: {}]
  %s1 = inlined_call_operand.hbm [shape: f32[16,1024], index: 1, kind: input, shape index: {}]
  %s2 = inlined_call_operand.hbm [shape: s8[1024,384], index: 2, kind: input, shape index: {}]
  %s3 = inlined_call_operand.vmem [shape: f32[1,384], index: 3, kind: input, shape index: {}]
  %s4 = inlined_call_operand.vmem [shape: f32[16,384], index: 4, kind: output, shape index: {}]
  %s5 = sld [smem:[#allocation0]]
  $region91: #{quantized_row_parallel_forward.1} parent=0
    _
  %s7 = ssub.s32 1, %s5
  %s8 = scalar_select 0, %s7, %s5
  %9 = sst [smem:[#allocation2]] %s0
  $region1: #{quantized_row_parallel_forward.1} parent=0
    #allocation3 [shape = 'u8[65536]{0}', space=vmem, size = 0x10000, scoped, tag = 'input window, operand 1, single buffered']
    #allocation4 [shape = 's32[2]{0}', space=sflag, size = 0x8, scoped, tag = 'scoped memory for quantized_row_parallel_forward.1']
    #allocation5 [shape = 'u8[262144]{0}', space=vmem, size = 0x40000, scoped, tag = 'input window, operand 2']
    #allocation6 [shape = 's32[2]{0}', space=sflag, size = 0x8, scoped, tag = 'scoped memory for quantized_row_parallel_forward.1']
    #allocation7 [shape = 'u8[16384]{0}', space=vmem, size = 0x4000, scoped, tag = 'output window, operand 0']
    %10 = vsyncpa [#allocation4], 0
    %11 = vsyncpa [#allocation6], 0
    %s12 = scalar_lea.sflag [#allocation6], 1
    %13 = vsyncpa %s12, 0
    loop: start=0, step=1, limit=5
    $region2: #{quantized_row_parallel_forward.1} parent=1 // loop_pre_header
      _
    $region3: #{quantized_row_parallel_forward.1} parent=1 // loop_header
      %s15 = sphi 0, %s19
      %p16 = scmp.ge.s32.totalorder %s15, 5
      %s22 = sphi 0, %s34
      %s23 = sphi 0, %s30
      %s24 = sphi 0, %s22
      %s25 = sphi 0, %s23
      %s26 = sphi 0, %s24
      %s27 = sphi 0, %s25
      %s35 = sphi 0, %s35
      %s37 = sphi 0, %s35
      %s38 = sphi 0, %s37
      %s52 = sphi 0, %s38
      %s58 = sphi 0, %s60
      %s61 = sphi 0, %s58
      %s62 = sphi 0, %s61
      %s78 = sphi 0, %s62
      %s84 = sphi 0, %s86
      %s87 = sphi 0, %s84
      %s88 = sphi 0, %s87
      %s104 = sphi 0, %s88
      %s110 = sphi 0, %s112
      %s113 = sphi 0, %s110
      %s114 = sphi 0, %s113
      %s130 = sphi 0, %s114
      %s138 = sphi 0, %s140
      %s141 = sphi 0, %s138
      %s142 = sphi 0, %s141
      %s158 = sphi 0, %s142
    $region4: #{quantized_row_parallel_forward.1} parent=1 // loop_header_branch
      %18 = sbr.rel (%p16) target = $region8
    $region5: #{quantized_row_parallel_forward.1} parent=1 // loop_body
      %s20 = ssub.s32 %s15, 1
      %s21 = ssub.s32 %s15, 2
      %s28 = sadd.s32 1, %s23
      %p29 = scmp.ge.s32.totalorder %s28, 3
      %s30 = scalar_select %p29, 0, %s28
      %s31 = sadd.s32 1, %s22
      %s32 = scalar_select %p29, %s31, %s22
      %p33 = scmp.ge.s32.totalorder %s32, 1
      %s34 = scalar_select %p33, 0, %s32
      %s36 = sadd.s32 %s35, 1
      %p39 = scmp.eq.s32.totalorder %s15, 2
      %p40 = scmp.ne.s32.totalorder %s35, %s37
      %p41 = scmp.eq.s32.totalorder %s15, 0
      %p42 = por %p40, %p41
      %p43 = scmp.ne.s32.totalorder %s35, %s37
      %p44 = scmp.eq.s32.totalorder %s20, 2
      %p45 = por %p43, %p44
      %p46 = scmp.ne.s32.totalorder %s37, %s38
      %p47 = scmp.eq.s32.totalorder %s20, 0
      %p48 = por %p46, %p47
      %p49 = scmp.ne.s32.totalorder %s37, %s38
      %p50 = scmp.eq.s32.totalorder %s21, 2
      %p51 = por %p49, %p50
      %p53 = scmp.ne.s32.totalorder %s38, %s52
      %p54 = scmp.eq.s32.totalorder %s21, 0
      %p55 = por %p53, %p54
      %s56 = ssub.s32 %s22, %s34
      %p57 = scmp.eq.s32.totalorder %s56, 0
      %s59 = sadd.s32 %s58, 1
      %s60 = scalar_select %p57, %s58, %s59
      %p63 = pneg %p57
      %p64 = scmp.eq.s32.totalorder %s15, 2
      %p65 = por %p63, %p64
      %p66 = scmp.ne.s32.totalorder %s58, %s61
      %p67 = scmp.eq.s32.totalorder %s15, 0
      %p68 = por %p66, %p67
      %p69 = scmp.ne.s32.totalorder %s58, %s61
      %p70 = scmp.eq.s32.totalorder %s20, 2
      %p71 = por %p69, %p70
      %p72 = scmp.ne.s32.totalorder %s61, %s62
      %p73 = scmp.eq.s32.totalorder %s20, 0
      %p74 = por %p72, %p73
      %p75 = scmp.ne.s32.totalorder %s61, %s62
      %p76 = scmp.eq.s32.totalorder %s21, 2
      %p77 = por %p75, %p76
      %p79 = scmp.ne.s32.totalorder %s62, %s78
      %p80 = scmp.eq.s32.totalorder %s21, 0
      %p81 = por %p79, %p80
      %s82 = ssub.s32 %s23, %s30
      %p83 = scmp.eq.s32.totalorder %s82, 0
      %s85 = sadd.s32 %s84, 1
      %s86 = scalar_select %p83, %s84, %s85
      %p89 = pneg %p83
      %p90 = scmp.eq.s32.totalorder %s15, 2
      %p91 = por %p89, %p90
      %p92 = scmp.ne.s32.totalorder %s84, %s87
      %p93 = scmp.eq.s32.totalorder %s15, 0
      %p94 = por %p92, %p93
      %p95 = scmp.ne.s32.totalorder %s84, %s87
      %p96 = scmp.eq.s32.totalorder %s20, 2
      %p97 = por %p95, %p96
      %p98 = scmp.ne.s32.totalorder %s87, %s88
      %p99 = scmp.eq.s32.totalorder %s20, 0
      %p100 = por %p98, %p99
      %p101 = scmp.ne.s32.totalorder %s87, %s88
      %p102 = scmp.eq.s32.totalorder %s21, 2
      %p103 = por %p101, %p102
      %p105 = scmp.ne.s32.totalorder %s88, %s104
      %p106 = scmp.eq.s32.totalorder %s21, 0
      %p107 = por %p105, %p106
      %s108 = ssub.s32 %s23, %s30
      %p109 = scmp.eq.s32.totalorder %s108, 0
      %s111 = sadd.s32 %s110, 1
      %s112 = scalar_select %p109, %s110, %s111
      %p115 = pneg %p109
      %p116 = scmp.eq.s32.totalorder %s15, 2
      %p117 = por %p115, %p116
      %p118 = scmp.ne.s32.totalorder %s110, %s113
      %p119 = scmp.eq.s32.totalorder %s15, 0
      %p120 = por %p118, %p119
      %p121 = scmp.ne.s32.totalorder %s110, %s113
      %p122 = scmp.eq.s32.totalorder %s20, 2
      %p123 = por %p121, %p122
      %p124 = scmp.ne.s32.totalorder %s113, %s114
      %p125 = scmp.eq.s32.totalorder %s20, 0
      %p126 = por %p124, %p125
      %p127 = scmp.ne.s32.totalorder %s113, %s114
      %p128 = scmp.eq.s32.totalorder %s21, 2
      %p129 = por %p127, %p128
      %p131 = scmp.ne.s32.totalorder %s114, %s130
      %p132 = scmp.eq.s32.totalorder %s21, 0
      %p133 = por %p131, %p132
      %s134 = ssub.s32 %s22, %s34
      %s135 = ssub.s32 %s23, %s30
      %s136 = sor.u32 %s134, %s135
      %p137 = scmp.eq.s32.totalorder %s136, 0
      %s139 = sadd.s32 %s138, 1
      %s140 = scalar_select %p137, %s138, %s139
      %p143 = pneg %p137
      %p144 = scmp.eq.s32.totalorder %s15, 2
      %p145 = por %p143, %p144
      %p146 = scmp.ne.s32.totalorder %s138, %s141
      %p147 = scmp.eq.s32.totalorder %s15, 0
      %p148 = por %p146, %p147
      %p149 = scmp.ne.s32.totalorder %s138, %s141
      %p150 = scmp.eq.s32.totalorder %s20, 2
      %p151 = por %p149, %p150
      %p152 = scmp.ne.s32.totalorder %s141, %s142
      %p153 = scmp.eq.s32.totalorder %s20, 0
      %p154 = por %p152, %p153
      %p155 = scmp.ne.s32.totalorder %s141, %s142
      %p156 = scmp.eq.s32.totalorder %s21, 2
      %p157 = por %p155, %p156
      %p159 = scmp.ne.s32.totalorder %s142, %s158
      %p160 = scmp.eq.s32.totalorder %s21, 0
      %p161 = por %p159, %p160
      %p162 = scmp.le.s32.totalorder 1, %s15
      %p163 = scmp.lt.s32.totalorder %s15, 4
      %p164 = pnand %p162, %p163
      %p165 = pneg %p164
      // Predicated region
      $region9: #{quantized_row_parallel_forward.1} parent=5 // pred_check
        _
      $region10: #{quantized_row_parallel_forward.1} parent=5 // pred_check_branch
        %167 = sbr.rel (%p164) target = $region12
      $region11: #{quantized_row_parallel_forward.1} parent=5 // pred_region
        %s168 = ssub.s32 %s15, 1
        // Predicated region
        $region13: #{quantized_row_parallel_forward.1} parent=11 // pred_check
          %p169 = pneg %p48
        $region14: #{quantized_row_parallel_forward.1} parent=11 // pred_check_branch
          %171 = sbr.rel (%p169) target = $region16
        $region15: #{quantized_row_parallel_forward.1} parent=11 // pred_region
          _
        $region16: #{quantized_row_parallel_forward.1} parent=11 // pred_fallthru
          _
        // Predicated region
        $region17: #{quantized_row_parallel_forward.1} parent=11 // pred_check
          %p172 = pneg %p74
        $region18: #{quantized_row_parallel_forward.1} parent=11 // pred_check_branch
          %174 = sbr.rel (%p172) target = $region20
        $region19: #{quantized_row_parallel_forward.1} parent=11 // pred_region
          %s175 = smul.u32 2, %s24
          %s177 = ssub.s32 2048, 2048
          %178 = vsyncadd [#allocation4], %s177
          %s179 = smul.addr %s175, 8
          %s180 = smul.addr %s179, 128
          %s181 = scalar_lea.hbm %s1, %s180
          %s182 = sshll.u32 [#allocation3], 4
          %s183 = int_to_ptr.vmem [resolvable:$true] %s182
          %188 = dma.hbm_to_vmem [thread:$0]  %s181, 2048, %s183, [#allocation4], 1024, 1024, 64
        $region20: #{quantized_row_parallel_forward.1} parent=11 // pred_fallthru
          _
      $region12: #{quantized_row_parallel_forward.1} parent=5 // pred_fallthru
        _
      %p189 = scmp.lt.s32.totalorder %s15, 3
      // Predicated region
      $region21: #{quantized_row_parallel_forward.1} parent=5 // pred_check
        %p190 = pneg %p189
      $region22: #{quantized_row_parallel_forward.1} parent=5 // pred_check_branch
        %192 = sbr.rel (%p190) target = $region24
      $region23: #{quantized_row_parallel_forward.1} parent=5 // pred_region
        // Predicated region
        $region25: #{quantized_row_parallel_forward.1} parent=23 // pred_check
          %p193 = pneg %p94
        $region26: #{quantized_row_parallel_forward.1} parent=23 // pred_check_branch
          %195 = sbr.rel (%p193) target = $region28
        $region27: #{quantized_row_parallel_forward.1} parent=23 // pred_region
          %s196 = sand.u32 %s84, 1
          %s197 = scalar_lea.sflag [#allocation6], %s196
          %s198 = sand.u32 %s84, 1
          %s199 = smul.addr %s198, 256
          %s200 = scalar_lea.vmem [#allocation5], %s199
          %s202 = ssub.s32 4096, 4096
          %203 = vsyncadd %s197, %s202
          %s204 = smul.addr %s23, 128
          %s205 = scalar_lea.hbm %s2, %s204
          %s206 = sshll.u32 %s200, 4
          %s207 = int_to_ptr.vmem [resolvable:$true] %s206
          %212 = dma.hbm_to_vmem [thread:$0]  %s205, 4096, %s207, %s197, 384, 128, 8
        $region28: #{quantized_row_parallel_forward.1} parent=23 // pred_fallthru
          _
        // Predicated region
        $region29: #{quantized_row_parallel_forward.1} parent=23 // pred_check
          %p213 = pneg %p120
        $region30: #{quantized_row_parallel_forward.1} parent=23 // pred_check_branch
          %215 = sbr.rel (%p213) target = $region32
        $region31: #{quantized_row_parallel_forward.1} parent=23 // pred_region
          %p216 = scmp.lt.s32.totalorder %s23, 2
          %s217 = scalar_select %p216, %s23, 2
          %s218 = scalar_lea.vmem %s3, %s217
        $region32: #{quantized_row_parallel_forward.1} parent=23 // pred_fallthru
          _
      $region24: #{quantized_row_parallel_forward.1} parent=5 // pred_fallthru
        _
      %p219 = scmp.le.s32.totalorder 1, %s15
      %p220 = scmp.lt.s32.totalorder %s15, 4
      %p221 = pnand %p219, %p220
      %p222 = pneg %p221
      // Predicated region
      $region33: #{quantized_row_parallel_forward.1} parent=5 // pred_check
        _
      $region34: #{quantized_row_parallel_forward.1} parent=5 // pred_check_branch
        %224 = sbr.rel (%p221) target = $region36
      $region35: #{quantized_row_parallel_forward.1} parent=5 // pred_region
        %s225 = ssub.s32 %s15, 1
        // Predicated region
        $region37: #{quantized_row_parallel_forward.1} parent=35 // pred_check
          %p226 = pneg %p74
        $region38: #{quantized_row_parallel_forward.1} parent=35 // pred_check_branch
          %228 = sbr.rel (%p226) target = $region40
        $region39: #{quantized_row_parallel_forward.1} parent=35 // pred_region
          %229 = dma.done [#allocation4], 2048
        $region40: #{quantized_row_parallel_forward.1} parent=35 // pred_fallthru
          _
        %s230 = sand.u32 %s87, 1
        %s231 = scalar_lea.sflag [#allocation6], %s230
        %s232 = sand.u32 %s87, 1
        %s233 = smul.addr %s232, 256
        %s234 = scalar_lea.vmem [#allocation5], %s233
        // Predicated region
        $region41: #{quantized_row_parallel_forward.1} parent=35 // pred_check
          %p235 = pneg %p100
        $region42: #{quantized_row_parallel_forward.1} parent=35 // pred_check_branch
          %237 = sbr.rel (%p235) target = $region44
        $region43: #{quantized_row_parallel_forward.1} parent=35 // pred_region
          %238 = dma.done %s231, 4096
        $region44: #{quantized_row_parallel_forward.1} parent=35 // pred_fallthru
          _
        %p239 = pneg %p48
        %p240 = pneg %p45
        %p241 = pneg %p74
        %p242 = pneg %p71
        %s243 = sand.u32 %s87, 1
        %s244 = scalar_lea.sflag [#allocation6], %s243
        %s245 = sand.u32 %s87, 1
        %s246 = smul.addr %s245, 256
        %s247 = scalar_lea.vmem [#allocation5], %s246
        %p248 = pneg %p100
        %p249 = pneg %p97
        %p250 = scmp.lt.s32.totalorder %s25, 2
        %s251 = scalar_select %p250, %s25, 2
        %s252 = scalar_lea.vmem %s3, %s251
        %p253 = pneg %p126
        %p254 = pneg %p123
        %p255 = pneg %p154
        %p256 = pneg %p151
        %s257 = sand.u32 %s141, 1
        %s258 = sand.u32 %s141, 1
        %s259 = smul.addr %s258, 16
        %s260 = scalar_lea.vmem [#allocation7], %s259
        %s261 = smul.u32 2, %s24
        %p262 = scmp.lt.s32.totalorder %s25, 2
        %s263 = scalar_select %p262, %s25, 2
        %s264 = scalar_lea.vmem %s3, %s263
        %s265 = smul.u32 2, %s24
        %v267 = vld [vmem:[#allocation3] sm:$0xff]
        %v268 = vld [vmem:[#allocation3 + $0x8] sm:$0xff]
        %v269 = vld [vmem:[#allocation3 + $0x10] sm:$0xff]
        %v270 = vld [vmem:[#allocation3 + $0x18] sm:$0xff]
        %v271 = vld [vmem:[#allocation3 + $0x20] sm:$0xff]
        %v272 = vld [vmem:[#allocation3 + $0x28] sm:$0xff]
        %v273 = vld [vmem:[#allocation3 + $0x30] sm:$0xff]
        %v274 = vld [vmem:[#allocation3 + $0x38] sm:$0xff]
        %v275 = vld [vmem:[#allocation3 + $0x40] sm:$0xff]
        %v276 = vld [vmem:[#allocation3 + $0x48] sm:$0xff]
        %v277 = vld [vmem:[#allocation3 + $0x50] sm:$0xff]
        %v278 = vld [vmem:[#allocation3 + $0x58] sm:$0xff]
        %v279 = vld [vmem:[#allocation3 + $0x60] sm:$0xff]
        %v280 = vld [vmem:[#allocation3 + $0x68] sm:$0xff]
        %v281 = vld [vmem:[#allocation3 + $0x70] sm:$0xff]
        %v282 = vld [vmem:[#allocation3 + $0x78] sm:$0xff]
        %v283 = vld [vmem:[%s234] sm:$0xff]
        %v284 = vld [vmem:[%s234 + $0x8] sm:$0xff]
        %v285 = vld [vmem:[%s234 + $0x10] sm:$0xff]
        %v286 = vld [vmem:[%s234 + $0x18] sm:$0xff]
        %v287 = vld [vmem:[%s234 + $0x20] sm:$0xff]
        %v288 = vld [vmem:[%s234 + $0x28] sm:$0xff]
        %v289 = vld [vmem:[%s234 + $0x30] sm:$0xff]
        %v290 = vld [vmem:[%s234 + $0x38] sm:$0xff]
        %v291 = vld [vmem:[%s234 + $0x40] sm:$0xff]
        %v292 = vld [vmem:[%s234 + $0x48] sm:$0xff]
        %v293 = vld [vmem:[%s234 + $0x50] sm:$0xff]
        %v294 = vld [vmem:[%s234 + $0x58] sm:$0xff]
        %v295 = vld [vmem:[%s234 + $0x60] sm:$0xff]
        %v296 = vld [vmem:[%s234 + $0x68] sm:$0xff]
        %v297 = vld [vmem:[%s234 + $0x70] sm:$0xff]
        %v298 = vld [vmem:[%s234 + $0x78] sm:$0xff]
        %v299 = vld [vmem:[%s234 + $0x80] sm:$0xff]
        %v300 = vld [vmem:[%s234 + $0x88] sm:$0xff]
        %v301 = vld [vmem:[%s234 + $0x90] sm:$0xff]
        %v302 = vld [vmem:[%s234 + $0x98] sm:$0xff]
        %v303 = vld [vmem:[%s234 + $0xa0] sm:$0xff]
        %v304 = vld [vmem:[%s234 + $0xa8] sm:$0xff]
        %v305 = vld [vmem:[%s234 + $0xb0] sm:$0xff]
        %v306 = vld [vmem:[%s234 + $0xb8] sm:$0xff]
        %v307 = vld [vmem:[%s234 + $0xc0] sm:$0xff]
        %v308 = vld [vmem:[%s234 + $0xc8] sm:$0xff]
        %v309 = vld [vmem:[%s234 + $0xd0] sm:$0xff]
        %v310 = vld [vmem:[%s234 + $0xd8] sm:$0xff]
        %v311 = vld [vmem:[%s234 + $0xe0] sm:$0xff]
        %v312 = vld [vmem:[%s234 + $0xe8] sm:$0xff]
        %v313 = vld [vmem:[%s234 + $0xf0] sm:$0xff]
        %v314 = vld [vmem:[%s234 + $0xf8] sm:$0xff]
        %v315 = vunpack.c.l.s8.bf16 %v283
        %v316 = vunpack.c.h.s8.bf16 %v283
        %v317 = vunpack.c.l.s8.bf16 %v284
        %v318 = vunpack.c.h.s8.bf16 %v284
        %v319 = vunpack.c.l.s8.bf16 %v285
        %v320 = vunpack.c.h.s8.bf16 %v285
        %v321 = vunpack.c.l.s8.bf16 %v286
        %v322 = vunpack.c.h.s8.bf16 %v286
        %v323 = vunpack.c.l.s8.bf16 %v287
        %v324 = vunpack.c.h.s8.bf16 %v287
        %v325 = vunpack.c.l.s8.bf16 %v288
        %v326 = vunpack.c.h.s8.bf16 %v288
        %v327 = vunpack.c.l.s8.bf16 %v289
        %v328 = vunpack.c.h.s8.bf16 %v289
        %v329 = vunpack.c.l.s8.bf16 %v290
        %v330 = vunpack.c.h.s8.bf16 %v290
        %v331 = vunpack.c.l.s8.bf16 %v291
        %v332 = vunpack.c.h.s8.bf16 %v291
        %v333 = vunpack.c.l.s8.bf16 %v292
        %v334 = vunpack.c.h.s8.bf16 %v292
        %v335 = vunpack.c.l.s8.bf16 %v293
        %v336 = vunpack.c.h.s8.bf16 %v293
        %v337 = vunpack.c.l.s8.bf16 %v294
        %v338 = vunpack.c.h.s8.bf16 %v294
        %v339 = vunpack.c.l.s8.bf16 %v295
        %v340 = vunpack.c.h.s8.bf16 %v295
        %v341 = vunpack.c.l.s8.bf16 %v296
        %v342 = vunpack.c.h.s8.bf16 %v296
        %v343 = vunpack.c.l.s8.bf16 %v297
        %v344 = vunpack.c.h.s8.bf16 %v297
        %v345 = vunpack.c.l.s8.bf16 %v298
        %v346 = vunpack.c.h.s8.bf16 %v298
        %v347 = vunpack.c.l.s8.bf16 %v299
        %v348 = vunpack.c.h.s8.bf16 %v299
        %v349 = vunpack.c.l.s8.bf16 %v300
        %v350 = vunpack.c.h.s8.bf16 %v300
        %v351 = vunpack.c.l.s8.bf16 %v301
        %v352 = vunpack.c.h.s8.bf16 %v301
        %v353 = vunpack.c.l.s8.bf16 %v302
        %v354 = vunpack.c.h.s8.bf16 %v302
        %v355 = vunpack.c.l.s8.bf16 %v303
        %v356 = vunpack.c.h.s8.bf16 %v303
        %v357 = vunpack.c.l.s8.bf16 %v304
        %v358 = vunpack.c.h.s8.bf16 %v304
        %v359 = vunpack.c.l.s8.bf16 %v305
        %v360 = vunpack.c.h.s8.bf16 %v305
        %v361 = vunpack.c.l.s8.bf16 %v306
        %v362 = vunpack.c.h.s8.bf16 %v306
        %v363 = vunpack.c.l.s8.bf16 %v307
        %v364 = vunpack.c.h.s8.bf16 %v307
        %v365 = vunpack.c.l.s8.bf16 %v308
        %v366 = vunpack.c.h.s8.bf16 %v308
        %v367 = vunpack.c.l.s8.bf16 %v309
        %v368 = vunpack.c.h.s8.bf16 %v309
        %v369 = vunpack.c.l.s8.bf16 %v310
        %v370 = vunpack.c.h.s8.bf16 %v310
        %v371 = vunpack.c.l.s8.bf16 %v311
        %v372 = vunpack.c.h.s8.bf16 %v311
        %v373 = vunpack.c.l.s8.bf16 %v312
        %v374 = vunpack.c.h.s8.bf16 %v312
        %v375 = vunpack.c.l.s8.bf16 %v313
        %v376 = vunpack.c.h.s8.bf16 %v313
        %v377 = vunpack.c.l.s8.bf16 %v314
        %v378 = vunpack.c.h.s8.bf16 %v314
        %v379 = vpack.c.bf16 %v275, %v267
        %v380 = vpack.c.bf16 %v276, %v268
        %v381 = vpack.c.bf16 %v277, %v269
        %v382 = vpack.c.bf16 %v278, %v270
        %v383 = vpack.c.bf16 %v279, %v271
        %v384 = vpack.c.bf16 %v280, %v272
        %v385 = vpack.c.bf16 %v281, %v273
        %v386 = vpack.c.bf16 %v282, %v274
        %v387 = vunpack.c.l.bf16 %v379
        %v388 = vunpack.c.l.bf16 %v380
        %v389 = vunpack.c.l.bf16 %v381
        %v390 = vunpack.c.l.bf16 %v382
        %v391 = vunpack.c.l.bf16 %v383
        %v392 = vunpack.c.l.bf16 %v384
        %v393 = vunpack.c.l.bf16 %v385
        %v394 = vunpack.c.l.bf16 %v386
        %v395 = vunpack.c.h.bf16 %v379
        %v396 = vunpack.c.h.bf16 %v380
        %v397 = vunpack.c.h.bf16 %v381
        %v398 = vunpack.c.h.bf16 %v382
        %v399 = vunpack.c.h.bf16 %v383
        %v400 = vunpack.c.h.bf16 %v384
        %v401 = vunpack.c.h.bf16 %v385
        %v402 = vunpack.c.h.bf16 %v386
        %v403 = vsub.f32 %v267, %v387
        %v404 = vsub.f32 %v268, %v388
        %v405 = vsub.f32 %v269, %v389
        %v406 = vsub.f32 %v270, %v390
        %v407 = vsub.f32 %v271, %v391
        %v408 = vsub.f32 %v272, %v392
        %v409 = vsub.f32 %v273, %v393
        %v410 = vsub.f32 %v274, %v394
        %v411 = vsub.f32 %v275, %v395
        %v412 = vsub.f32 %v276, %v396
        %v413 = vsub.f32 %v277, %v397
        %v414 = vsub.f32 %v278, %v398
        %v415 = vsub.f32 %v279, %v399
        %v416 = vsub.f32 %v280, %v400
        %v417 = vsub.f32 %v281, %v401
        %v418 = vsub.f32 %v282, %v402
        %v419 = vpack.c.bf16 %v411, %v403
        %v420 = vpack.c.bf16 %v412, %v404
        %v421 = vpack.c.bf16 %v413, %v405
        %v422 = vpack.c.bf16 %v414, %v406
        %v423 = vpack.c.bf16 %v415, %v407
        %v424 = vpack.c.bf16 %v416, %v408
        %v425 = vpack.c.bf16 %v417, %v409
        %v426 = vpack.c.bf16 %v418, %v410
        %427 = vmatprep.subr.bf16.mxu0 0
        %428 = vmatpush1.bf16.msra.mxu0 %v322
        %429 = vmatprep.subr.bf16.mxu0 0
        %430 = vmatpush1.bf16.msra.mxu0 %v321
        %431 = vmatprep.subr.bf16.mxu0 0
        %432 = vmatpush1.bf16.msra.mxu0 %v320
        %433 = vmatprep.subr.bf16.mxu0 0
        %434 = vmatpush1.bf16.msra.mxu0 %v319
        %435 = vmatprep.subr.bf16.mxu0 0
        %436 = vmatpush1.bf16.msra.mxu0 %v318
        %437 = vmatprep.subr.bf16.mxu0 0
        %438 = vmatpush1.bf16.msra.mxu0 %v317
        %439 = vmatprep.subr.bf16.mxu0 0
        %440 = vmatpush1.bf16.msra.mxu0 %v316
        %441 = vmatprep.subr.bf16.mxu0 0
        %442 = vmatpush1.bf16.msra.mxu0 %v315
        %443 = vmatprep.subr.bf16.mxu0 0
        %444 = vmatpush2.bf16.msra.mxu0 %v330
        %445 = vmatprep.subr.bf16.mxu0 0
        %446 = vmatpush2.bf16.msra.mxu0 %v329
        %447 = vmatprep.subr.bf16.mxu0 0
        %448 = vmatpush2.bf16.msra.mxu0 %v328
        %449 = vmatprep.subr.bf16.mxu0 0
        %450 = vmatpush2.bf16.msra.mxu0 %v327
        %451 = vmatprep.subr.bf16.mxu0 0
        %452 = vmatpush2.bf16.msra.mxu0 %v326
        %453 = vmatprep.subr.bf16.mxu0 0
        %454 = vmatpush2.bf16.msra.mxu0 %v325
        %455 = vmatprep.subr.bf16.mxu0 0
        %456 = vmatpush2.bf16.msra.mxu0 %v324
        %457 = vmatprep.subr.bf16.mxu0 0
        %458 = vmatpush2.bf16.msra.mxu0 %v323
        %459 = vmatprep.mubr.bf16.mxu0 %v420
        %460 = vmatmul.mubr.bf16.gmra.mxu0 %v419
        %v461 = vpop.f32.mrf.mxu0
        %v462 = vadd.f32 0.0, %v461
        %v463 = vpop.f32.mrf.mxu0
        %v464 = vpop.f32.mrf.mxu0
        %v465 = vadd.f32 0.0, %v464
        %v466 = vpop.f32.mrf.mxu0
        %467 = vdwg.mxu0
        %468 = vmatprep.subr.bf16.mxu0 0
        %469 = vmatpush1.bf16.msra.mxu0 %v338
        %470 = vmatprep.subr.bf16.mxu0 0
        %471 = vmatpush1.bf16.msra.mxu0 %v337
        %472 = vmatprep.subr.bf16.mxu0 0
        %473 = vmatpush1.bf16.msra.mxu0 %v336
        %474 = vmatprep.subr.bf16.mxu0 0
        %475 = vmatpush1.bf16.msra.mxu0 %v335
        %476 = vmatprep.subr.bf16.mxu0 0
        %477 = vmatpush1.bf16.msra.mxu0 %v334
        %478 = vmatprep.subr.bf16.mxu0 0
        %479 = vmatpush1.bf16.msra.mxu0 %v333
        %480 = vmatprep.subr.bf16.mxu0 0
        %481 = vmatpush1.bf16.msra.mxu0 %v332
        %482 = vmatprep.subr.bf16.mxu0 0
        %483 = vmatpush1.bf16.msra.mxu0 %v331
        %484 = vmatprep.subr.bf16.mxu0 0
        %485 = vmatpush2.bf16.msra.mxu0 %v346
        %486 = vmatprep.subr.bf16.mxu0 0
        %487 = vmatpush2.bf16.msra.mxu0 %v345
        %488 = vmatprep.subr.bf16.mxu0 0
        %489 = vmatpush2.bf16.msra.mxu0 %v344
        %490 = vmatprep.subr.bf16.mxu0 0
        %491 = vmatpush2.bf16.msra.mxu0 %v343
        %492 = vmatprep.subr.bf16.mxu0 0
        %493 = vmatpush2.bf16.msra.mxu0 %v342
        %494 = vmatprep.subr.bf16.mxu0 0
        %495 = vmatpush2.bf16.msra.mxu0 %v341
        %496 = vmatprep.subr.bf16.mxu0 0
        %497 = vmatpush2.bf16.msra.mxu0 %v340
        %498 = vmatprep.subr.bf16.mxu0 0
        %499 = vmatpush2.bf16.msra.mxu0 %v339
        %500 = vmatprep.mubr.bf16.mxu0 %v422
        %501 = vmatmul.mubr.bf16.gmra.mxu0 %v421
        %v502 = vpop.f32.mrf.mxu0
        %v503 = vadd.f32 %v462, %v502
        %v504 = vpop.f32.mrf.mxu0
        %v505 = vpop.f32.mrf.mxu0
        %v506 = vadd.f32 %v465, %v505
        %v507 = vpop.f32.mrf.mxu0
        %508 = vdwg.mxu0
        %509 = vmatprep.subr.bf16.mxu0 0
        %510 = vmatpush1.bf16.msra.mxu0 %v354
        %511 = vmatprep.subr.bf16.mxu0 0
        %512 = vmatpush1.bf16.msra.mxu0 %v353
        %513 = vmatprep.subr.bf16.mxu0 0
        %514 = vmatpush1.bf16.msra.mxu0 %v352
        %515 = vmatprep.subr.bf16.mxu0 0
        %516 = vmatpush1.bf16.msra.mxu0 %v351
        %517 = vmatprep.subr.bf16.mxu0 0
        %518 = vmatpush1.bf16.msra.mxu0 %v350
        %519 = vmatprep.subr.bf16.mxu0 0
        %520 = vmatpush1.bf16.msra.mxu0 %v349
        %521 = vmatprep.subr.bf16.mxu0 0
        %522 = vmatpush1.bf16.msra.mxu0 %v348
        %523 = vmatprep.subr.bf16.mxu0 0
        %524 = vmatpush1.bf16.msra.mxu0 %v347
        %525 = vmatprep.subr.bf16.mxu0 0
        %526 = vmatpush2.bf16.msra.mxu0 %v362
        %527 = vmatprep.subr.bf16.mxu0 0
        %528 = vmatpush2.bf16.msra.mxu0 %v361
        %529 = vmatprep.subr.bf16.mxu0 0
        %530 = vmatpush2.bf16.msra.mxu0 %v360
        %531 = vmatprep.subr.bf16.mxu0 0
        %532 = vmatpush2.bf16.msra.mxu0 %v359
        %533 = vmatprep.subr.bf16.mxu0 0
        %534 = vmatpush2.bf16.msra.mxu0 %v358
        %535 = vmatprep.subr.bf16.mxu0 0
        %536 = vmatpush2.bf16.msra.mxu0 %v357
        %537 = vmatprep.subr.bf16.mxu0 0
        %538 = vmatpush2.bf16.msra.mxu0 %v356
        %539 = vmatprep.subr.bf16.mxu0 0
        %540 = vmatpush2.bf16.msra.mxu0 %v355
        %541 = vmatprep.mubr.bf16.mxu0 %v424
        %542 = vmatmul.mubr.bf16.gmra.mxu0 %v423
        %v543 = vpop.f32.mrf.mxu0
        %v544 = vadd.f32 %v503, %v543
        %v545 = vpop.f32.mrf.mxu0
        %v546 = vpop.f32.mrf.mxu0
        %v547 = vadd.f32 %v506, %v546
        %v548 = vpop.f32.mrf.mxu0
        %549 = vdwg.mxu0
        %550 = vmatprep.subr.bf16.mxu0 0
        %551 = vmatpush1.bf16.msra.mxu0 %v370
        %552 = vmatprep.subr.bf16.mxu0 0
        %553 = vmatpush1.bf16.msra.mxu0 %v369
        %554 = vmatprep.subr.bf16.mxu0 0
        %555 = vmatpush1.bf16.msra.mxu0 %v368
        %556 = vmatprep.subr.bf16.mxu0 0
        %557 = vmatpush1.bf16.msra.mxu0 %v367
        %558 = vmatprep.subr.bf16.mxu0 0
        %559 = vmatpush1.bf16.msra.mxu0 %v366
        %560 = vmatprep.subr.bf16.mxu0 0
        %561 = vmatpush1.bf16.msra.mxu0 %v365
        %562 = vmatprep.subr.bf16.mxu0 0
        %563 = vmatpush1.bf16.msra.mxu0 %v364
        %564 = vmatprep.subr.bf16.mxu0 0
        %565 = vmatpush1.bf16.msra.mxu0 %v363
        %566 = vmatprep.subr.bf16.mxu0 0
        %567 = vmatpush2.bf16.msra.mxu0 %v378
        %568 = vmatprep.subr.bf16.mxu0 0
        %569 = vmatpush2.bf16.msra.mxu0 %v377
        %570 = vmatprep.subr.bf16.mxu0 0
        %571 = vmatpush2.bf16.msra.mxu0 %v376
        %572 = vmatprep.subr.bf16.mxu0 0
        %573 = vmatpush2.bf16.msra.mxu0 %v375
        %574 = vmatprep.subr.bf16.mxu0 0
        %575 = vmatpush2.bf16.msra.mxu0 %v374
        %576 = vmatprep.subr.bf16.mxu0 0
        %577 = vmatpush2.bf16.msra.mxu0 %v373
        %578 = vmatprep.subr.bf16.mxu0 0
        %579 = vmatpush2.bf16.msra.mxu0 %v372
        %580 = vmatprep.subr.bf16.mxu0 0
        %581 = vmatpush2.bf16.msra.mxu0 %v371
        %582 = vmatprep.mubr.bf16.mxu0 %v426
        %583 = vmatmul.mubr.bf16.gmra.mxu0 %v425
        %v584 = vpop.f32.mrf.mxu0
        %v585 = vadd.f32 %v544, %v584
        %v586 = vpop.f32.mrf.mxu0
        %v587 = vpop.f32.mrf.mxu0
        %v588 = vadd.f32 %v547, %v587
        %v589 = vpop.f32.mrf.mxu0
        %590 = vdwg.mxu0
        %591 = vmatprep.subr.bf16.mxu0 0
        %592 = vmatpush1.bf16.msra.mxu0 %v322
        %593 = vmatprep.subr.bf16.mxu0 0
        %594 = vmatpush1.bf16.msra.mxu0 %v321
        %595 = vmatprep.subr.bf16.mxu0 0
        %596 = vmatpush1.bf16.msra.mxu0 %v320
        %597 = vmatprep.subr.bf16.mxu0 0
        %598 = vmatpush1.bf16.msra.mxu0 %v319
        %599 = vmatprep.subr.bf16.mxu0 0
        %600 = vmatpush1.bf16.msra.mxu0 %v318
        %601 = vmatprep.subr.bf16.mxu0 0
        %602 = vmatpush1.bf16.msra.mxu0 %v317
        %603 = vmatprep.subr.bf16.mxu0 0
        %604 = vmatpush1.bf16.msra.mxu0 %v316
        %605 = vmatprep.subr.bf16.mxu0 0
        %606 = vmatpush1.bf16.msra.mxu0 %v315
        %607 = vmatprep.subr.bf16.mxu0 0
        %608 = vmatpush2.bf16.msra.mxu0 %v330
        %609 = vmatprep.subr.bf16.mxu0 0
        %610 = vmatpush2.bf16.msra.mxu0 %v329
        %611 = vmatprep.subr.bf16.mxu0 0
        %612 = vmatpush2.bf16.msra.mxu0 %v328
        %613 = vmatprep.subr.bf16.mxu0 0
        %614 = vmatpush2.bf16.msra.mxu0 %v327
        %615 = vmatprep.subr.bf16.mxu0 0
        %616 = vmatpush2.bf16.msra.mxu0 %v326
        %617 = vmatprep.subr.bf16.mxu0 0
        %618 = vmatpush2.bf16.msra.mxu0 %v325
        %619 = vmatprep.subr.bf16.mxu0 0
        %620 = vmatpush2.bf16.msra.mxu0 %v324
        %621 = vmatprep.subr.bf16.mxu0 0
        %622 = vmatpush2.bf16.msra.mxu0 %v323
        %623 = vmatprep.mubr.bf16.mxu0 %v380
        %624 = vmatmul.mubr.bf16.gmra.mxu0 %v379
        %v625 = vpop.f32.mrf.mxu0
        %v626 = vadd.f32 %v585, %v625
        %v627 = vpop.f32.mrf.mxu0
        %v628 = vpop.f32.mrf.mxu0
        %v629 = vadd.f32 %v588, %v628
        %v630 = vpop.f32.mrf.mxu0
        %631 = vdwg.mxu0
        %632 = vmatprep.subr.bf16.mxu0 0
        %633 = vmatpush1.bf16.msra.mxu0 %v338
        %634 = vmatprep.subr.bf16.mxu0 0
        %635 = vmatpush1.bf16.msra.mxu0 %v337
        %636 = vmatprep.subr.bf16.mxu0 0
        %637 = vmatpush1.bf16.msra.mxu0 %v336
        %638 = vmatprep.subr.bf16.mxu0 0
        %639 = vmatpush1.bf16.msra.mxu0 %v335
        %640 = vmatprep.subr.bf16.mxu0 0
        %641 = vmatpush1.bf16.msra.mxu0 %v334
        %642 = vmatprep.subr.bf16.mxu0 0
        %643 = vmatpush1.bf16.msra.mxu0 %v333
        %644 = vmatprep.subr.bf16.mxu0 0
        %645 = vmatpush1.bf16.msra.mxu0 %v332
        %646 = vmatprep.subr.bf16.mxu0 0
        %647 = vmatpush1.bf16.msra.mxu0 %v331
        %648 = vmatprep.subr.bf16.mxu0 0
        %649 = vmatpush2.bf16.msra.mxu0 %v346
        %650 = vmatprep.subr.bf16.mxu0 0
        %651 = vmatpush2.bf16.msra.mxu0 %v345
        %652 = vmatprep.subr.bf16.mxu0 0
        %653 = vmatpush2.bf16.msra.mxu0 %v344
        %654 = vmatprep.subr.bf16.mxu0 0
        %655 = vmatpush2.bf16.msra.mxu0 %v343
        %656 = vmatprep.subr.bf16.mxu0 0
        %657 = vmatpush2.bf16.msra.mxu0 %v342
        %658 = vmatprep.subr.bf16.mxu0 0
        %659 = vmatpush2.bf16.msra.mxu0 %v341
        %660 = vmatprep.subr.bf16.mxu0 0
        %661 = vmatpush2.bf16.msra.mxu0 %v340
        %662 = vmatprep.subr.bf16.mxu0 0
        %663 = vmatpush2.bf16.msra.mxu0 %v339
        %664 = vmatprep.mubr.bf16.mxu0 %v382
        %665 = vmatmul.mubr.bf16.gmra.mxu0 %v381
        %v666 = vpop.f32.mrf.mxu0
        %v667 = vadd.f32 %v626, %v666
        %v668 = vpop.f32.mrf.mxu0
        %v669 = vpop.f32.mrf.mxu0
        %v670 = vadd.f32 %v629, %v669
        %v671 = vpop.f32.mrf.mxu0
        %672 = vdwg.mxu0
        %673 = vmatprep.subr.bf16.mxu0 0
        %674 = vmatpush1.bf16.msra.mxu0 %v354
        %675 = vmatprep.subr.bf16.mxu0 0
        %676 = vmatpush1.bf16.msra.mxu0 %v353
        %677 = vmatprep.subr.bf16.mxu0 0
        %678 = vmatpush1.bf16.msra.mxu0 %v352
        %679 = vmatprep.subr.bf16.mxu0 0
        %680 = vmatpush1.bf16.msra.mxu0 %v351
        %681 = vmatprep.subr.bf16.mxu0 0
        %682 = vmatpush1.bf16.msra.mxu0 %v350
        %683 = vmatprep.subr.bf16.mxu0 0
        %684 = vmatpush1.bf16.msra.mxu0 %v349
        %685 = vmatprep.subr.bf16.mxu0 0
        %686 = vmatpush1.bf16.msra.mxu0 %v348
        %687 = vmatprep.subr.bf16.mxu0 0
        %688 = vmatpush1.bf16.msra.mxu0 %v347
        %689 = vmatprep.subr.bf16.mxu0 0
        %690 = vmatpush2.bf16.msra.mxu0 %v362
        %691 = vmatprep.subr.bf16.mxu0 0
        %692 = vmatpush2.bf16.msra.mxu0 %v361
        %693 = vmatprep.subr.bf16.mxu0 0
        %694 = vmatpush2.bf16.msra.mxu0 %v360
        %695 = vmatprep.subr.bf16.mxu0 0
        %696 = vmatpush2.bf16.msra.mxu0 %v359
        %697 = vmatprep.subr.bf16.mxu0 0
        %698 = vmatpush2.bf16.msra.mxu0 %v358
        %699 = vmatprep.subr.bf16.mxu0 0
        %700 = vmatpush2.bf16.msra.mxu0 %v357
        %701 = vmatprep.subr.bf16.mxu0 0
        %702 = vmatpush2.bf16.msra.mxu0 %v356
        %703 = vmatprep.subr.bf16.mxu0 0
        %704 = vmatpush2.bf16.msra.mxu0 %v355
        %705 = vmatprep.mubr.bf16.mxu0 %v384
        %706 = vmatmul.mubr.bf16.gmra.mxu0 %v383
        %v707 = vpop.f32.mrf.mxu0
        %v708 = vadd.f32 %v667, %v707
        %v709 = vpop.f32.mrf.mxu0
        %v710 = vpop.f32.mrf.mxu0
        %v711 = vadd.f32 %v670, %v710
        %v712 = vpop.f32.mrf.mxu0
        %713 = vdwg.mxu0
        %714 = vmatprep.subr.bf16.mxu0 0
        %715 = vmatpush1.bf16.msra.mxu0 %v370
        %716 = vmatprep.subr.bf16.mxu0 0
        %717 = vmatpush1.bf16.msra.mxu0 %v369
        %718 = vmatprep.subr.bf16.mxu0 0
        %719 = vmatpush1.bf16.msra.mxu0 %v368
        %720 = vmatprep.subr.bf16.mxu0 0
        %721 = vmatpush1.bf16.msra.mxu0 %v367
        %722 = vmatprep.subr.bf16.mxu0 0
        %723 = vmatpush1.bf16.msra.mxu0 %v366
        %724 = vmatprep.subr.bf16.mxu0 0
        %725 = vmatpush1.bf16.msra.mxu0 %v365
        %726 = vmatprep.subr.bf16.mxu0 0
        %727 = vmatpush1.bf16.msra.mxu0 %v364
        %728 = vmatprep.subr.bf16.mxu0 0
        %729 = vmatpush1.bf16.msra.mxu0 %v363
        %730 = vmatprep.subr.bf16.mxu0 0
        %731 = vmatpush2.bf16.msra.mxu0 %v378
        %732 = vmatprep.subr.bf16.mxu0 0
        %733 = vmatpush2.bf16.msra.mxu0 %v377
        %734 = vmatprep.subr.bf16.mxu0 0
        %735 = vmatpush2.bf16.msra.mxu0 %v376
        %736 = vmatprep.subr.bf16.mxu0 0
        %737 = vmatpush2.bf16.msra.mxu0 %v375
        %738 = vmatprep.subr.bf16.mxu0 0
        %739 = vmatpush2.bf16.msra.mxu0 %v374
        %740 = vmatprep.subr.bf16.mxu0 0
        %741 = vmatpush2.bf16.msra.mxu0 %v373
        %742 = vmatprep.subr.bf16.mxu0 0
        %743 = vmatpush2.bf16.msra.mxu0 %v372
        %744 = vmatprep.subr.bf16.mxu0 0
        %745 = vmatpush2.bf16.msra.mxu0 %v371
        %746 = vmatprep.mubr.bf16.mxu0 %v386
        %747 = vmatmul.mubr.bf16.gmra.mxu0 %v385
        %v748 = vpop.f32.mrf.mxu0
        %v749 = vadd.f32 %v708, %v748
        %v750 = vpop.f32.mrf.mxu0
        %v751 = vpop.f32.mrf.mxu0
        %v752 = vadd.f32 %v711, %v751
        %v753 = vpop.f32.mrf.mxu0
        %754 = vdwg.mxu0
        %s755 = sld [smem:[#allocation2]]
        %v756 = vstv %s755
        %v757 = vmul.f32 %v749, %v756
        %v758 = vmul.f32 %v752, %v756
        %v759 = vld [vmem:[%s264] sm:$0x1]
        %v761 = vlaneseq
        %v762 = vshrl.u32 %v761, 7
        %v763 = vsub.s32 0, %v762
        %v764 = vrot.slane %v759, %v763
        %v766 = vadd.f32 %v757, %v764
        %v767 = vadd.f32 %v758, %v764
        %768 = vst [vmem:[%s260] sm:$0xff] %v766
        %769 = vst [vmem:[%s260 + $0x8] sm:$0xff] %v767
        %s770 = sand.u32 %s141, 1
        %s771 = sand.u32 %s141, 1
        %s772 = smul.addr %s771, 16
        %s773 = scalar_lea.vmem [#allocation7], %s772
        // Predicated region
        $region45: #{quantized_row_parallel_forward.1} parent=35 // pred_check
          %p774 = pneg %p151
        $region46: #{quantized_row_parallel_forward.1} parent=35 // pred_check_branch
          %776 = sbr.rel (%p774) target = $region48
        $region47: #{quantized_row_parallel_forward.1} parent=35 // pred_region
          %s777 = smul.u32 2, %s24
          %s778 = smul.addr %s777, 3
          %s779 = sadd.s32 %s25, %s778
          %s780 = smul.addr %s779, 8
          %s781 = scalar_lea.vmem %s4, %s780
          // Predicated region
          $region49: #{quantized_row_parallel_forward.1} parent=47 // pred_check
            _
          $region50: #{quantized_row_parallel_forward.1} parent=47 // pred_check_branch
            %783 = sbr.rel (0) target = $region52
          $region51: #{quantized_row_parallel_forward.1} parent=47 // pred_region
            // Predicated region
            $region53: #{quantized_row_parallel_forward.1} parent=51 // pred_check
              _
            $region54: #{quantized_row_parallel_forward.1} parent=51 // pred_check_branch
              %785 = sbr.rel (0) target = $region56
            $region55: #{quantized_row_parallel_forward.1} parent=51 // pred_region
              // Predicated region
              $region68: #{quantized_row_parallel_forward.1} parent=55 // pred_check
                _
              $region69: #{quantized_row_parallel_forward.1} parent=55 // pred_check_branch
                %803 = sbr.rel (0) target = $region71
              $region70: #{quantized_row_parallel_forward.1} parent=55 // pred_region
                loop: start=0, step=1, limit=1
                $region72: #{quantized_row_parallel_forward.1} parent=70 // loop_pre_header
                  _
                $region73: #{quantized_row_parallel_forward.1} parent=70 // loop_header
                  %s805 = sphi 0, %s809
                  %p806 = scmp.ge.s32.totalorder %s805, 1
                  %s810 = sphi %s773, %s773
                  %s811 = sphi %s781, %s781
                $region74: #{quantized_row_parallel_forward.1} parent=70 // loop_header_branch
                  %808 = sbr.rel (%p806) target = $region78
                $region75: #{quantized_row_parallel_forward.1} parent=70 // loop_body
                  %v812 = vld [vmem:[%s810] sm:$0xff]
                  %813 = vst [vmem:[%s811] sm:$0xff] %v812
                  %v814 = vld [vmem:[%s810 + $0x8] sm:$0xff]
                  %815 = vst [vmem:[%s811 + $0x18] sm:$0xff] %v814
                $region76: #{quantized_row_parallel_forward.1} parent=70 // loop_footer
                  %s809 = sadd.s32 1, %s805
                $region77: #{quantized_row_parallel_forward.1} parent=70 // loop_footer_branch
                  %804 = sbr.rel target = $region73
                $region78: #{quantized_row_parallel_forward.1} parent=70 // loop_exit
                  _
              $region71: #{quantized_row_parallel_forward.1} parent=55 // pred_fallthru
                _
              // Predicated region
              $region79: #{quantized_row_parallel_forward.1} parent=55 // pred_check
                _
              $region80: #{quantized_row_parallel_forward.1} parent=55 // pred_check_branch
                %817 = sbr.rel target = $region82
              $region81: #{quantized_row_parallel_forward.1} parent=55 // pred_region
                _
              $region82: #{quantized_row_parallel_forward.1} parent=55 // pred_fallthru
                _
            $region56: #{quantized_row_parallel_forward.1} parent=51 // pred_fallthru
              _
            // Predicated region
            $region57: #{quantized_row_parallel_forward.1} parent=51 // pred_check
              _
            $region58: #{quantized_row_parallel_forward.1} parent=51 // pred_check_branch
              %787 = sbr.rel target = $region60
            $region59: #{quantized_row_parallel_forward.1} parent=51 // pred_region
              %s789 = ssub.s32 256, 1
              loop: start=0, step=1, limit=1
              $region61: #{quantized_row_parallel_forward.1} parent=59 // loop_pre_header
                _
              $region62: #{quantized_row_parallel_forward.1} parent=59 // loop_header
                %s791 = sphi 0, %s795
                %p792 = scmp.ge.s32.totalorder %s791, 1
                %s796 = sphi %s773, %s773
                %s797 = sphi %s781, %s781
              $region63: #{quantized_row_parallel_forward.1} parent=59 // loop_header_branch
                %794 = sbr.rel (%p792) target = $region67
              $region64: #{quantized_row_parallel_forward.1} parent=59 // loop_body
                %v798 = vld [vmem:[%s796] sm:%s789]
                %799 = vst [vmem:[%s797] sm:%s789] %v798
                %v800 = vld [vmem:[%s796 + $0x8] sm:%s789]
                %801 = vst [vmem:[%s797 + $0x18] sm:%s789] %v800
              $region65: #{quantized_row_parallel_forward.1} parent=59 // loop_footer
                %s795 = sadd.s32 1, %s791
              $region66: #{quantized_row_parallel_forward.1} parent=59 // loop_footer_branch
                %790 = sbr.rel target = $region62
              $region67: #{quantized_row_parallel_forward.1} parent=59 // loop_exit
                _
            $region60: #{quantized_row_parallel_forward.1} parent=51 // pred_fallthru
              _
          $region52: #{quantized_row_parallel_forward.1} parent=47 // pred_fallthru
            _
          %818 = vnop
        $region48: #{quantized_row_parallel_forward.1} parent=35 // pred_fallthru
          _
      $region36: #{quantized_row_parallel_forward.1} parent=5 // pred_fallthru
        _
      %p819 = scmp.le.s32.totalorder 2, %s15
      // Predicated region
      $region83: #{quantized_row_parallel_forward.1} parent=5 // pred_check
        %p820 = pneg %p819
      $region84: #{quantized_row_parallel_forward.1} parent=5 // pred_check_branch
        %822 = sbr.rel (%p820) target = $region86
      $region85: #{quantized_row_parallel_forward.1} parent=5 // pred_region
        %s823 = ssub.s32 %s15, 2
        // Predicated region
        $region87: #{quantized_row_parallel_forward.1} parent=85 // pred_check
          %p824 = pneg %p157
        $region88: #{quantized_row_parallel_forward.1} parent=85 // pred_check_branch
          %826 = sbr.rel (%p824) target = $region90
        $region89: #{quantized_row_parallel_forward.1} parent=85 // pred_region
          %s827 = sand.u32 %s142, 1
          %s828 = sand.u32 %s142, 1
          %s829 = smul.addr %s828, 16
          %s830 = scalar_lea.vmem [#allocation7], %s829
        $region90: #{quantized_row_parallel_forward.1} parent=85 // pred_fallthru
          _
      $region86: #{quantized_row_parallel_forward.1} parent=5 // pred_fallthru
        _
    $region6: #{quantized_row_parallel_forward.1} parent=1 // loop_footer
      %s19 = sadd.s32 1, %s15
    $region7: #{quantized_row_parallel_forward.1} parent=1 // loop_footer_branch
      %14 = sbr.rel target = $region3
    $region8: #{quantized_row_parallel_forward.1} parent=1 // loop_exit
      _
    %831 = vsyncpa [#allocation4], 1
    %s832 = scalar_lea.sflag [#allocation4], 1
    %833 = vsyncpa %s832, 1
    %834 = vsyncpa [#allocation6], 1
    %s835 = scalar_lea.sflag [#allocation6], 1
    %836 = vsyncpa %s835, 1

</llo_original>
